<compile_context>
chip_gen: v7x
topology: tpu7x:2x2x1
jax: 0.10.0
libtpu: 0.0.40
codegen_flags: <defaults>
</compile_context>

<pallas_src>
import math
import functools
import jax
import jax.numpy as jnp
from jax.experimental import pallas as pl
from jax.experimental.pallas import tpu as pltpu


def _mlp_kernel(xT_ref, w1T_ref, b1T_ref, w2T_ref, b2T_ref, oT_ref):
    # xT_ref : (in_dims, tile_b)   -- batch on lanes
    # w1T_ref: (hidden, in_dims)   -- resident
    # b1T_ref: (hidden, 1)         -- resident
    # w2T_ref: (out_dims, hidden)  -- resident
    # b2T_ref: (out_dims, 1)       -- resident
    # oT_ref : (out_dims, tile_b)  -- lane-dense output
    xT = xT_ref[...]
    w1T = w1T_ref[...]
    in_dims = xT.shape[0]

    # Layer 1: K = in_dims (=3) contraction as rank-1 VPU MACs (cheaper than a
    # heavily padded MXU matmul; keeps the MXU free for layer 2).
    h = w1T[:, 0:1] * xT[0:1, :]                          # (hidden, tile_b)
    for k in range(1, in_dims):
        h = h + w1T[:, k:k + 1] * xT[k:k + 1, :]
    h = jnp.maximum(h + b1T_ref[...], 0.0)                # bias + ReLU

    # Layer 2: (out_dims, hidden) @ (hidden, tile_b) on the MXU.
    yT = jnp.dot(w2T_ref[...], h, preferred_element_type=jnp.float32) + b2T_ref[...]
    oT_ref[...] = yT.astype(oT_ref.dtype)


@functools.partial(jax.jit, static_argnames=("tile_b",))
def vanilla_pmtg_forward(x, w1, b1, w2, b2, *, tile_b=1024):
    """Fused MLP forward. x: (B, in_dims) f32 -> (B, out_dims) f32.

    Identical semantics to relu(x @ w1 + b1) @ w2 + b2, i.e. the PyTorch module
    with weights stored as (fan_in, fan_out)."""
    B, in_dims = x.shape
    hidden = w1.shape[1]
    out_dims = w2.shape[1]

    # Batch lands on the lane axis -> tiles must be multiples of 128 lanes.
    tile_b = max(128, (tile_b // 128) * 128)
    tile = min(tile_b, ((B + 127) // 128) * 128)
    padded_b = ((B + tile - 1) // tile) * tile
    grid = (padded_b // tile,)

    # Layout plumbing (outside the kernel): transpose so batch is last, pad batch.
    xT = jnp.pad(x.T, ((0, 0), (0, padded_b - B)))        # (in_dims, padded_b)
    w1T = w1.T                                            # (hidden, in_dims)
    b1T = b1.reshape(hidden, 1)
    w2T = w2.T                                            # (out_dims, hidden)
    b2T = b2.reshape(out_dims, 1)

    flops = 2 * padded_b * (in_dims * hidden + hidden * out_dims)
    bytes_accessed = 4 * (padded_b * (in_dims + out_dims)
                          + in_dims * hidden + hidden
                          + hidden * out_dims + out_dims)

    vmem = pltpu.MemorySpace.VMEM
    oT = pl.pallas_call(
        _mlp_kernel,
        out_shape=jax.ShapeDtypeStruct((out_dims, padded_b), jnp.float32),
        grid=grid,
        in_specs=[
            pl.BlockSpec((in_dims, tile), lambda i: (0, i), memory_space=vmem),
            pl.BlockSpec((hidden, in_dims), lambda i: (0, 0), memory_space=vmem),
            pl.BlockSpec((hidden, 1), lambda i: (0, 0), memory_space=vmem),
            pl.BlockSpec((out_dims, hidden), lambda i: (0, 0), memory_space=vmem),
            pl.BlockSpec((out_dims, 1), lambda i: (0, 0), memory_space=vmem),
        ],
        out_specs=pl.BlockSpec((out_dims, tile), lambda i: (0, i), memory_space=vmem),
        compiler_params=pltpu.CompilerParams(dimension_semantics=("parallel",)),
        cost_estimate=pl.CostEstimate(
            flops=flops, transcendentals=0, bytes_accessed=bytes_accessed),
    )(xT, w1T, b1T, w2T, b2T)

    return oT[:, :B].T                                    # back to (B, out_dims)


def init_pmtg_params(key, in_dims=3, out_dims=4, arch=(32,)):
    """Deterministic init mirroring PyTorch's init_weights:
    each Linear(fan_in, fan_out) gets weight & bias ~ U(-1/sqrt(fan_in), 1/sqrt(fan_in)).
    Weights stored as (fan_in, fan_out)."""
    hidden = arch[0]
    k1, k2, k3, k4 = jax.random.split(key, 4)
    s1 = 1.0 / math.sqrt(in_dims)
    s2 = 1.0 / math.sqrt(hidden)
    w1 = jax.random.uniform(k1, (in_dims, hidden), jnp.float32, -s1, s1)
    b1 = jax.random.uniform(k2, (1, hidden), jnp.float32, -s1, s1)
    w2 = jax.random.uniform(k3, (hidden, out_dims), jnp.float32, -s2, s2)
    b2 = jax.random.uniform(k4, (1, out_dims), jnp.float32, -s2, s2)
    return w1, b1, w2, b2


if __name__ == "__main__":
    key = jax.random.PRNGKey(0)
    kx, kp = jax.random.split(key)

    IN, HID, OUT = 3, 32, 4
    w1, b1, w2, b2 = init_pmtg_params(kp, in_dims=IN, out_dims=OUT, arch=(HID,))

    def ref(xx):
        return jnp.maximum(xx @ w1 + b1, 0.0) @ w2 + b2

    # Small batch (module-sized input): single tile, padded to 128 lanes.
    x_small = jax.random.normal(kx, (8, IN), jnp.float32)
    y_small = jax.block_until_ready(vanilla_pmtg_forward(x_small, w1, b1, w2, b2))
    assert y_small.shape == (8, OUT)
    assert jnp.allclose(y_small, ref(x_small), atol=1e-5, rtol=1e-5)

    # Non-multiple-of-128 batch exercising the grid (multiple tiles) + padding.
    x_big = jax.random.normal(kx, (300, IN), jnp.float32)
    y_big = jax.block_until_ready(
        vanilla_pmtg_forward(x_big, w1, b1, w2, b2, tile_b=128))
    assert y_big.shape == (300, OUT)
    assert jnp.allclose(y_big, ref(x_big), atol=1e-5, rtol=1e-5)

    print("KERNEL_OK")
</pallas_src>

<mosaic_0001>
module attributes {stable_mosaic.version = 11 : i64} {
  func.func @_mlp_kernel(%arg0: i32, %arg1: memref<3x128xf32, #tpu.memory_space<vmem>>, %arg2: memref<32x3xf32, #tpu.memory_space<vmem>>, %arg3: memref<32x1xf32, #tpu.memory_space<vmem>>, %arg4: memref<4x32xf32, #tpu.memory_space<vmem>>, %arg5: memref<4x1xf32, #tpu.memory_space<vmem>>, %arg6: memref<4x128xf32, #tpu.memory_space<vmem>>) attributes {dimension_semantics = [#tpu.dimension_semantics<parallel>], iteration_bounds = array<i64: 1>, scalar_prefetch = 0 : i64, scratch_operands = 0 : i64, tpu.core_type = #tpu.core_type<tc>, window_params = [{transform_indices = @transform_0, window_bounds = array<i64: 3, 128>}, {pipeline_mode = #tpu.pipeline_mode<synchronous>, transform_indices = @transform_1, window_bounds = array<i64: 32, 3>}, {pipeline_mode = #tpu.pipeline_mode<synchronous>, transform_indices = @transform_2, window_bounds = array<i64: 32, 1>}, {pipeline_mode = #tpu.pipeline_mode<synchronous>, transform_indices = @transform_3, window_bounds = array<i64: 4, 32>}, {pipeline_mode = #tpu.pipeline_mode<synchronous>, transform_indices = @transform_4, window_bounds = array<i64: 4, 1>}, {transform_indices = @transform_5, window_bounds = array<i64: 4, 128>}]} {
    %c0 = arith.constant 0 : index
    %c0_0 = arith.constant 0 : index
    %0 = vector.load %arg1[%c0, %c0_0] : memref<3x128xf32, #tpu.memory_space<vmem>>, vector<3x128xf32>
    %c0_1 = arith.constant 0 : index
    %c0_2 = arith.constant 0 : index
    %1 = vector.load %arg2[%c0_1, %c0_2] : memref<32x3xf32, #tpu.memory_space<vmem>>, vector<32x3xf32>
    %2 = vector.extract_strided_slice %1 {offsets = [0, 0], sizes = [32, 1], strides = [1, 1]} : vector<32x3xf32> to vector<32x1xf32>
    %3 = vector.extract_strided_slice %0 {offsets = [0, 0], sizes = [1, 128], strides = [1, 1]} : vector<3x128xf32> to vector<1x128xf32>
    %4 = vector.broadcast %2 : vector<32x1xf32> to vector<32x128xf32>
    %5 = vector.broadcast %3 : vector<1x128xf32> to vector<32x128xf32>
    %6 = arith.mulf %4, %5 : vector<32x128xf32>
    %7 = vector.extract_strided_slice %1 {offsets = [0, 1], sizes = [32, 1], strides = [1, 1]} : vector<32x3xf32> to vector<32x1xf32>
    %8 = vector.extract_strided_slice %0 {offsets = [1, 0], sizes = [1, 128], strides = [1, 1]} : vector<3x128xf32> to vector<1x128xf32>
    %9 = vector.broadcast %7 : vector<32x1xf32> to vector<32x128xf32>
    %10 = vector.broadcast %8 : vector<1x128xf32> to vector<32x128xf32>
    %11 = arith.mulf %9, %10 : vector<32x128xf32>
    %12 = arith.addf %6, %11 : vector<32x128xf32>
    %13 = vector.extract_strided_slice %1 {offsets = [0, 2], sizes = [32, 1], strides = [1, 1]} : vector<32x3xf32> to vector<32x1xf32>
    %14 = vector.extract_strided_slice %0 {offsets = [2, 0], sizes = [1, 128], strides = [1, 1]} : vector<3x128xf32> to vector<1x128xf32>
    %15 = vector.broadcast %13 : vector<32x1xf32> to vector<32x128xf32>
    %16 = vector.broadcast %14 : vector<1x128xf32> to vector<32x128xf32>
    %17 = arith.mulf %15, %16 : vector<32x128xf32>
    %18 = arith.addf %12, %17 : vector<32x128xf32>
    %c0_3 = arith.constant 0 : index
    %c0_4 = arith.constant 0 : index
    %19 = vector.load %arg3[%c0_3, %c0_4] : memref<32x1xf32, #tpu.memory_space<vmem>>, vector<32x1xf32>
    %20 = vector.broadcast %19 : vector<32x1xf32> to vector<32x128xf32>
    %21 = arith.addf %18, %20 : vector<32x128xf32>
    %cst = arith.constant 0.000000e+00 : f32
    %22 = vector.broadcast %cst : f32 to vector<32x128xf32>
    %23 = arith.maximumf %21, %22 : vector<32x128xf32>
    %c0_5 = arith.constant 0 : index
    %c0_6 = arith.constant 0 : index
    %24 = vector.load %arg4[%c0_5, %c0_6] : memref<4x32xf32, #tpu.memory_space<vmem>>, vector<4x32xf32>
    %cst_7 = arith.constant dense<0.000000e+00> : vector<4x128xf32>
    %25 = tpu.matmul %24, %23, %cst_7 {dimension_numbers = #tpu.dot_dimension_numbers<[1], [0], [0], [1], [0, 0, 1, 1], [], []>} : vector<4x32xf32>, vector<32x128xf32>, vector<4x128xf32> -> vector<4x128xf32>
    %c0_8 = arith.constant 0 : index
    %c0_9 = arith.constant 0 : index
    %26 = vector.load %arg5[%c0_8, %c0_9] : memref<4x1xf32, #tpu.memory_space<vmem>>, vector<4x1xf32>
    %27 = vector.broadcast %26 : vector<4x1xf32> to vector<4x128xf32>
    %28 = arith.addf %25, %27 : vector<4x128xf32>
    %c0_10 = arith.constant 0 : index
    %c0_11 = arith.constant 0 : index
    %29 = vector.load %arg6[%c0_10, %c0_11] : memref<4x128xf32, #tpu.memory_space<vmem>>, vector<4x128xf32>
    tpu.vector_store %arg6[%c0_10, %c0_11], %28 {strides = array<i32>} : memref<4x128xf32, #tpu.memory_space<vmem>>, vector<4x128xf32>,
    return
  }
  func.func @transform_0(%arg0: i32) -> (i32, i32) {
    %c0_i32 = arith.constant 0 : i32
    %c0_i32_0 = arith.constant 0 : i32
    return %c0_i32, %arg0 : i32, i32
  }
  func.func @transform_1(%arg0: i32) -> (i32, i32) {
    %c0_i32 = arith.constant 0 : i32
    %c0_i32_0 = arith.constant 0 : i32
    %c0_i32_1 = arith.constant 0 : i32
    return %c0_i32, %c0_i32_0 : i32, i32
  }
  func.func @transform_2(%arg0: i32) -> (i32, i32) {
    %c0_i32 = arith.constant 0 : i32
    %c0_i32_0 = arith.constant 0 : i32
    %c0_i32_1 = arith.constant 0 : i32
    return %c0_i32, %c0_i32_0 : i32, i32
  }
  func.func @transform_3(%arg0: i32) -> (i32, i32) {
    %c0_i32 = arith.constant 0 : i32
    %c0_i32_0 = arith.constant 0 : i32
    %c0_i32_1 = arith.constant 0 : i32
    return %c0_i32, %c0_i32_0 : i32, i32
  }
  func.func @transform_4(%arg0: i32) -> (i32, i32) {
    %c0_i32 = arith.constant 0 : i32
    %c0_i32_0 = arith.constant 0 : i32
    %c0_i32_1 = arith.constant 0 : i32
    return %c0_i32, %c0_i32_0 : i32, i32
  }
  func.func @transform_5(%arg0: i32) -> (i32, i32) {
    %c0_i32 = arith.constant 0 : i32
    %c0_i32_0 = arith.constant 0 : i32
    return %c0_i32, %arg0 : i32, i32
  }
}

</mosaic_0001>

<llo_original>
// kernel: vanilla_pmtg_forward.1
$region0: #{vanilla_pmtg_forward.1}
  #allocation0 [shape = 'u32[]', space=smem, size = 0x4, offset = 0x4, fixed_abs, tag = 'smem constant byte address 0x4 - core index']
  #allocation1 [shape = 'u32[144,128]{1,0:T(1,128)}', space=vmem, size = 0x12000, scoped, tag = 'internal scratch']
  %s0 = inlined_call_operand.vmem [shape: f32[3,128], index: 0, kind: input, shape index: {}]
  %s1 = inlined_call_operand.vmem [shape: f32[32,3], index: 1, kind: input, shape index: {}]
  %s2 = inlined_call_operand.vmem [shape: f32[32,1], index: 2, kind: input, shape index: {}]
  %s3 = inlined_call_operand.vmem [shape: f32[4,32], index: 3, kind: input, shape index: {}]
  %s4 = inlined_call_operand.vmem [shape: f32[4,1], index: 4, kind: input, shape index: {}]
  %s5 = inlined_call_operand.vmem [shape: f32[4,128], index: 5, kind: output, shape index: {}]
  %s6 = sld [smem:[#allocation0]]
  $region30: #{vanilla_pmtg_forward.1} parent=0
    _
  %s8 = ssub.s32 1, %s6
  %s9 = scalar_select 0, %s8, %s6
  // Predicated region
  $region2: #{vanilla_pmtg_forward.1} parent=0 // pred_check
    _
  $region3: #{vanilla_pmtg_forward.1} parent=0 // pred_check_branch
    %11 = sbr.rel (0) target = $region5
  $region4: #{vanilla_pmtg_forward.1} parent=0 // pred_region
    _
  $region5: #{vanilla_pmtg_forward.1} parent=0 // pred_fallthru
    _
  // Predicated region
  $region6: #{vanilla_pmtg_forward.1} parent=0 // pred_check
    _
  $region7: #{vanilla_pmtg_forward.1} parent=0 // pred_check_branch
    %13 = sbr.rel (0) target = $region9
  $region8: #{vanilla_pmtg_forward.1} parent=0 // pred_region
    _
  $region9: #{vanilla_pmtg_forward.1} parent=0 // pred_fallthru
    _
  // Predicated region
  $region10: #{vanilla_pmtg_forward.1} parent=0 // pred_check
    _
  $region11: #{vanilla_pmtg_forward.1} parent=0 // pred_check_branch
    %15 = sbr.rel (0) target = $region13
  $region12: #{vanilla_pmtg_forward.1} parent=0 // pred_region
    _
  $region13: #{vanilla_pmtg_forward.1} parent=0 // pred_fallthru
    _
  // Predicated region
  $region14: #{vanilla_pmtg_forward.1} parent=0 // pred_check
    _
  $region15: #{vanilla_pmtg_forward.1} parent=0 // pred_check_branch
    %17 = sbr.rel (0) target = $region17
  $region16: #{vanilla_pmtg_forward.1} parent=0 // pred_region
    _
  $region17: #{vanilla_pmtg_forward.1} parent=0 // pred_fallthru
    _
  // Predicated region
  $region18: #{vanilla_pmtg_forward.1} parent=0 // pred_check
    _
  $region19: #{vanilla_pmtg_forward.1} parent=0 // pred_check_branch
    %19 = sbr.rel (0) target = $region21
  $region20: #{vanilla_pmtg_forward.1} parent=0 // pred_region
    _
  $region21: #{vanilla_pmtg_forward.1} parent=0 // pred_fallthru
    _
  %v20 = vld [vmem:[%s0] sm:$0x7]
  %v21 = vld [vmem:[%s1] sm:$0xff]
  %v22 = vld [vmem:[%s1 + $0x8] sm:$0xff]
  %v23 = vld [vmem:[%s1 + $0x10] sm:$0xff]
  %v24 = vld [vmem:[%s1 + $0x18] sm:$0xff]
  %26 = vset.pattern.permute.xlu0 0
  %27 = vperm.xlu0 %26, %v21
  %v28 = vpop.permute.xlu0 %27
  %31 = vset.pattern.permute.xlu0 0
  %32 = vperm.xlu0 %31, %v22
  %v33 = vpop.permute.xlu0 %32
  %36 = vset.pattern.permute.xlu0 0
  %37 = vperm.xlu0 %36, %v23
  %v38 = vpop.permute.xlu0 %37
  %41 = vset.pattern.permute.xlu0 0
  %42 = vperm.xlu0 %41, %v24
  %v43 = vpop.permute.xlu0 %42
  %v45 = vlaneseq
  %v46 = vshrl.u32 %v45, 7
  %v47 = vsub.s32 0, %v46
  %v48 = vrot.slane %v20, %v47
  %v49 = vmul.f32 %v28, %v48
  %v50 = vmul.f32 %v33, %v48
  %v51 = vmul.f32 %v38, %v48
  %v52 = vmul.f32 %v43, %v48
  %53 = vset.pattern.permute.xlu0 1
  %54 = vperm.xlu0 %53, %v21
  %v55 = vpop.permute.xlu0 %54
  %57 = vset.pattern.permute.xlu0 1
  %58 = vperm.xlu0 %57, %v22
  %v59 = vpop.permute.xlu0 %58
  %61 = vset.pattern.permute.xlu0 1
  %62 = vperm.xlu0 %61, %v23
  %v63 = vpop.permute.xlu0 %62
  %65 = vset.pattern.permute.xlu0 1
  %66 = vperm.xlu0 %65, %v24
  %v67 = vpop.permute.xlu0 %66
  %v69 = vlaneseq
  %v70 = vshrl.u32 %v69, 7
  %v71 = vsub.s32 1, %v70
  %v72 = vrot.slane %v20, %v71
  %v73 = vmul.f32 %v55, %v72
  %v74 = vmul.f32 %v59, %v72
  %v75 = vmul.f32 %v63, %v72
  %v76 = vmul.f32 %v67, %v72
  %v77 = vadd.f32 %v49, %v73
  %v78 = vadd.f32 %v50, %v74
  %v79 = vadd.f32 %v51, %v75
  %v80 = vadd.f32 %v52, %v76
  %81 = vset.pattern.permute.xlu0 2
  %82 = vperm.xlu0 %81, %v21
  %v83 = vpop.permute.xlu0 %82
  %85 = vset.pattern.permute.xlu0 2
  %86 = vperm.xlu0 %85, %v22
  %v87 = vpop.permute.xlu0 %86
  %89 = vset.pattern.permute.xlu0 2
  %90 = vperm.xlu0 %89, %v23
  %v91 = vpop.permute.xlu0 %90
  %93 = vset.pattern.permute.xlu0 2
  %94 = vperm.xlu0 %93, %v24
  %v95 = vpop.permute.xlu0 %94
  %v97 = vlaneseq
  %v98 = vshrl.u32 %v97, 7
  %v99 = vsub.s32 2, %v98
  %v100 = vrot.slane %v20, %v99
  %v101 = vmul.f32 %v83, %v100
  %v102 = vmul.f32 %v87, %v100
  %v103 = vmul.f32 %v91, %v100
  %v104 = vmul.f32 %v95, %v100
  %v105 = vadd.f32 %v77, %v101
  %v106 = vadd.f32 %v78, %v102
  %v107 = vadd.f32 %v79, %v103
  %v108 = vadd.f32 %v80, %v104
  %v109 = vld [vmem:[%s2] sm:$0xff]
  %v110 = vld [vmem:[%s2 + $0x8] sm:$0xff]
  %v111 = vld [vmem:[%s2 + $0x10] sm:$0xff]
  %v112 = vld [vmem:[%s2 + $0x18] sm:$0xff]
  %114 = vset.pattern.permute.xlu0 0
  %115 = vperm.xlu0 %114, %v109
  %v116 = vpop.permute.xlu0 %115
  %119 = vset.pattern.permute.xlu0 0
  %120 = vperm.xlu0 %119, %v110
  %v121 = vpop.permute.xlu0 %120
  %124 = vset.pattern.permute.xlu0 0
  %125 = vperm.xlu0 %124, %v111
  %v126 = vpop.permute.xlu0 %125
  %129 = vset.pattern.permute.xlu0 0
  %130 = vperm.xlu0 %129, %v112
  %v131 = vpop.permute.xlu0 %130
  %v133 = vadd.f32 %v105, %v116
  %v134 = vadd.f32 %v106, %v121
  %v135 = vadd.f32 %v107, %v126
  %v136 = vadd.f32 %v108, %v131
  %v137 = vmax.f32 %v133, 0.0
  %v138 = vmax.f32 %v134, 0.0
  %v139 = vmax.f32 %v135, 0.0
  %v140 = vmax.f32 %v136, 0.0
  %v141 = vld [vmem:[%s3] sm:$0xf]
  %v142 = vld [vmem:[%s4] sm:$0xf]
  %144 = vset.pattern.permute.xlu0 0
  %145 = vperm.xlu0 %144, %v142
  %v146 = vpop.permute.xlu0 %145
  %vm148 = vcmask 261120
  %v150 = vsel %vm148, %v141, 0
  %152 = vmatprep.subr.mxu0 0.0
  %153 = vmatpush1.msra.mxu0 %v137
  %154 = vmatprep.subr.mxu0 0.0
  %155 = vmatpush1.msra.mxu0 %v138
  %156 = vmatprep.subr.mxu0 0.0
  %157 = vmatpush1.msra.mxu0 %v139
  %158 = vmatprep.subr.mxu0 0.0
  %159 = vmatpush1.msra.mxu0 %v140
  %160 = vmatprep.subr.mxu0 0.0
  %161 = vmatpush1.msra.mxu0 0.0
  %162 = vmatprep.subr.mxu0 0.0
  %163 = vmatpush1.msra.mxu0 0.0
  %164 = vmatprep.subr.mxu0 0.0
  %165 = vmatpush1.msra.mxu0 0.0
  %166 = vmatprep.subr.mxu0 0.0
  %167 = vmatpush1.msra.mxu0 0.0
  %168 = vmatprep.subr.mxu0 0.0
  %169 = vmatpush1.msra.mxu0 0.0
  %170 = vmatprep.subr.mxu0 0.0
  %171 = vmatpush1.msra.mxu0 0.0
  %172 = vmatprep.subr.mxu0 0.0
  %173 = vmatpush1.msra.mxu0 0.0
  %174 = vmatprep.subr.mxu0 0.0
  %175 = vmatpush1.msra.mxu0 0.0
  %176 = vmatprep.subr.mxu0 0.0
  %177 = vmatpush1.msra.mxu0 0.0
  %178 = vmatprep.subr.mxu0 0.0
  %179 = vmatpush1.msra.mxu0 0.0
  %180 = vmatprep.subr.mxu0 0.0
  %181 = vmatpush1.msra.mxu0 0.0
  %182 = vmatprep.subr.mxu0 0.0
  %183 = vmatpush1.msra.mxu0 0.0
  %184 = vmatprep.subr.mxu0 0.0
  %185 = vmatpush1.msra.mxu0 0.0
  %186 = vmatprep.subr.mxu0 0.0
  %187 = vmatpush1.msra.mxu0 0.0
  %188 = vmatprep.subr.mxu0 0.0
  %189 = vmatpush1.msra.mxu0 0.0
  %190 = vmatprep.subr.mxu0 0.0
  %191 = vmatpush1.msra.mxu0 0.0
  %192 = vmatprep.subr.mxu0 0.0
  %193 = vmatpush1.msra.mxu0 0.0
  %194 = vmatprep.subr.mxu0 0.0
  %195 = vmatpush1.msra.mxu0 0.0
  %196 = vmatprep.subr.mxu0 0.0
  %197 = vmatpush1.msra.mxu0 0.0
  %198 = vmatprep.subr.mxu0 0.0
  %199 = vmatpush1.msra.mxu0 0.0
  %200 = vmatprep.subr.mxu0 0.0
  %201 = vmatpush1.msra.mxu0 0.0
  %202 = vmatprep.subr.mxu0 0.0
  %203 = vmatpush1.msra.mxu0 0.0
  %204 = vmatprep.subr.mxu0 0.0
  %205 = vmatpush1.msra.mxu0 0.0
  %206 = vmatprep.subr.mxu0 0.0
  %207 = vmatpush1.msra.mxu0 0.0
  %208 = vmatprep.subr.mxu0 0.0
  %209 = vmatpush1.msra.mxu0 0.0
  %210 = vmatprep.subr.mxu0 0.0
  %211 = vmatpush1.msra.mxu0 0.0
  %212 = vmatprep.subr.mxu0 0.0
  %213 = vmatpush1.msra.mxu0 0.0
  %214 = vmatprep.subr.mxu0 0.0
  %215 = vmatpush1.msra.mxu0 0.0
  %216 = vmatprep.mubr.f32.mxu0 0.0
  %217 = vmatmul.mubr.f32.gmra.mrb[0].mxu0 %v150
  %v218 = vpop.f32.mrb[0].mxu0
  %v219 = vadd.f32 %v146, %v218
  %v220 = vpop.f32.mrb[0].mxu0
  %221 = vdwg.mxu0
  %222 = vst [vmem:[%s5] sm:$0xf] %v219
  // Predicated region
  $region22: #{vanilla_pmtg_forward.1} parent=0 // pred_check
    _
  $region23: #{vanilla_pmtg_forward.1} parent=0 // pred_check_branch
    %224 = sbr.rel (0) target = $region25
  $region24: #{vanilla_pmtg_forward.1} parent=0 // pred_region
    _
  $region25: #{vanilla_pmtg_forward.1} parent=0 // pred_fallthru
    _
  // Predicated region
  $region26: #{vanilla_pmtg_forward.1} parent=0 // pred_check
    _
  $region27: #{vanilla_pmtg_forward.1} parent=0 // pred_check_branch
    %226 = sbr.rel (0) target = $region29
  $region28: #{vanilla_pmtg_forward.1} parent=0 // pred_region
    _
  $region29: #{vanilla_pmtg_forward.1} parent=0 // pred_fallthru
    _

</llo_original>
